<compile_context>
chip_gen: v6e
topology: v6e:2x2x1
jax: 0.10.0
libtpu: 0.0.40
codegen_flags: <defaults>
</compile_context>

<pallas_src>
import jax
import jax.numpy as jnp
from jax.experimental import pallas as pl
from jax.experimental.pallas import tpu as pltpu

IGNORE_INDEX = 255


def _weighted_ce(logits_blk, tgt_blk, w0, w1):
    """Per-pixel weighted 2-way cross-entropy (reduction='none', ignored -> 0).

    logits_blk: (B, 1, 2, Rt, L) float (f32 / bf16)
    tgt_blk:    (B, 1, Rt, L) int32 / uint8 with values {0, 1, IGNORE_INDEX}
    returns     (B, Rt, L) float32
    """
    lg = logits_blk.astype(jnp.float32)
    l0 = lg[:, 0, 0]                                 # (B, Rt, L)
    l1 = lg[:, 0, 1]                                 # (B, Rt, L)
    t = tgt_blk[:, 0].astype(jnp.int32)              # (B, Rt, L)

    # Numerically stable 2-class log-sum-exp: one exp + one log per pixel.
    hi = jnp.maximum(l0, l1)
    lo = jnp.minimum(l0, l1)
    lse = hi + jnp.log(1.0 + jnp.exp(lo - hi))

    valid = t != IGNORE_INDEX
    is1 = t == 1
    picked = jnp.where(is1, l1, l0)
    w = jnp.where(is1, w1, w0)
    # Ignored pixels contribute 0 (matches F.cross_entropy reduction='none').
    return jnp.where(valid, w * (lse - picked), 0.0)


def _plane_kernel(cls_ref, cw_ref, logits_ref, tgt_ref, out_ref):
    """Per-pixel loss plane for classes that need top-k selection."""
    del cls_ref  # class ids are only consumed by the index_maps
    i = pl.program_id(0)
    loss = _weighted_ce(logits_ref[...], tgt_ref[...], cw_ref[i, 0], cw_ref[i, 1])
    out_ref[...] = loss[:, None].astype(out_ref.dtype)        # (B, 1, Rt, L)


def _sum_kernel(cls_ref, cw_ref, logits_ref, tgt_ref, acc_ref):
    """Per-class partial loss sums for classes without top-k (no plane I/O)."""
    del cls_ref
    i = pl.program_id(0)
    j = pl.program_id(1)

    @pl.when(j == 0)
    def _():
        acc_ref[...] = jnp.zeros_like(acc_ref)

    loss = _weighted_ce(logits_ref[...], tgt_ref[...], cw_ref[i, 0], cw_ref[i, 1])
    partial = jnp.sum(jnp.sum(loss, axis=0), axis=0)          # (L,)
    acc_ref[...] += partial[None, None, :]                    # (1, 1, L)


def _pixel_tiling(H, W, B):
    """Factor H*W into (R, L) and pick a row tile Rt that exactly divides R.

    L (lane dim) is a multiple of 128 dividing H*W when possible, else the
    natural W (full-extent last dim is always legal).  Rt is a multiple-of-8
    divisor of R (or full R), sized for ~256K pixels per grid step: per-step
    overhead amortized, double-buffered VMEM well under every generation's
    budget, and no ragged edge blocks (needed so the sum-kernel accumulator
    never sees padded garbage rows).
    """
    HW = H * W
    L = None
    for cand in (1024, 512, 256, 128):
        if HW % cand == 0:
            L = cand
            break
    if L is None:
        R, L = H, W                      # free reshape fallback
    else:
        R = HW // L
    target_rows = max(8, (256 * 1024) // (max(B, 1) * L))
    if R <= target_rows:
        return R, L, R                   # full extent -> always legal
    best = None
    for rt in range(8, target_rows + 1, 8):       # largest divisor <= target
        if R % rt == 0:
            best = rt
    if best is None:
        for rt in range(target_rows + 8, R, 8):   # smallest divisor > target
            if R % rt == 0:
                best = rt
                break
    if best is None:
        best = R
    return R, L, best


def _class_in_specs(B, Rt, L):
    """Common in_specs: SMEM weights + class-selected logits/target tiles."""
    return [
        pl.BlockSpec(memory_space=pltpu.SMEM),                                   # (G, 2) weights
        pl.BlockSpec((B, 1, 2, Rt, L), lambda i, j, cls: (0, cls[i], 0, j, 0)),  # logits
        pl.BlockSpec((B, 1, Rt, L), lambda i, j, cls: (0, cls[i], j, 0)),        # targets
    ]


def _topk_plane_call(logits, tgt, cw, cls_ids, R, L, Rt):
    """Returns per-pixel weighted CE losses (B, G, H*W) for the given classes."""
    B = logits.shape[0]
    G = int(cls_ids.shape[0])
    n_rt = R // Rt
    out = pl.pallas_call(
        _plane_kernel,
        out_shape=jax.ShapeDtypeStruct((B, G, R, L), jnp.float32),
        grid_spec=pltpu.PrefetchScalarGridSpec(
            num_scalar_prefetch=1,
            grid=(G, n_rt),
            in_specs=_class_in_specs(B, Rt, L),
            out_specs=pl.BlockSpec((B, 1, Rt, L), lambda i, j, cls: (0, i, j, 0)),
        ),
        compiler_params=pltpu.CompilerParams(
            dimension_semantics=("parallel", "parallel")),
    )(cls_ids, cw, logits, tgt)
    return out.reshape(B, G, R * L)


def _class_sum_call(logits, tgt, cw_scaled, cls_ids, R, L, Rt):
    """Returns (G, 1, L) per-class partial loss sums (weights pre-scaled)."""
    B = logits.shape[0]
    G = int(cls_ids.shape[0])
    n_rt = R // Rt
    return pl.pallas_call(
        _sum_kernel,
        out_shape=jax.ShapeDtypeStruct((G, 1, L), jnp.float32),
        grid_spec=pltpu.PrefetchScalarGridSpec(
            num_scalar_prefetch=1,
            grid=(G, n_rt),
            in_specs=_class_in_specs(B, Rt, L),
            out_specs=pl.BlockSpec((1, 1, L), lambda i, j, cls: (i, 0, 0)),
        ),
        compiler_params=pltpu.CompilerParams(
            dimension_semantics=("parallel", "arbitrary")),
    )(cls_ids, cw_scaled, logits, tgt)


def hdmap_loss(prediction, target, class_weights, training_weights,
               use_top_k, top_k_ratio):
    """Matches HDmapLoss.forward."""
    B, C, H, W = prediction.shape
    N = target.shape[1]
    assert C == 2 * N
    HW = H * W
    R, L, Rt = _pixel_tiling(H, W, B)

    # Contiguous (free) reshapes only — no HBM transpose, no dtype up-casts.
    logits = prediction.reshape(B, N, 2, R, L)
    if target.dtype == jnp.uint8 or target.dtype == jnp.int32:
        tgt = target.reshape(B, N, R, L)
    else:
        tgt = target.astype(jnp.int32).reshape(B, N, R, L)
    cw = jnp.asarray(class_weights, jnp.float32)               # (N, 2)
    tw = [float(w) for w in training_weights]

    topk_ids = [i for i in range(N) if use_top_k[i]]
    plain_ids = [i for i in range(N) if not use_top_k[i]]

    total = jnp.float32(0.0)

    if plain_ids:
        ids = jnp.asarray(plain_ids, jnp.int32)
        # Fold training weights into the class weights: the whole non-top-k
        # contribution becomes sum(partial_sums) / (B*HW).
        cw_scaled = cw[ids, :] * jnp.asarray([tw[i] for i in plain_ids],
                                             jnp.float32)[:, None]
        partial = _class_sum_call(logits, tgt, cw_scaled, ids, R, L, Rt)
        total = total + jnp.sum(partial) / jnp.float32(B * HW)

    if topk_ids:
        ids = jnp.asarray(topk_ids, jnp.int32)
        plane = _topk_plane_call(logits, tgt, cw[ids, :], ids, R, L, Rt)
        for g, ci in enumerate(topk_ids):
            cur = plane[:, g]                                  # (B, HW)
            # torch sorts descending and keeps the first k values.
            # Guard k >= 1 so tiny ratios don't give an empty (NaN) mean.
            k = max(1, int(top_k_ratio[ci] * HW))
            # TODO(synk): torch.sort / top-k has no clean Pallas TPU lowering;
            # selection is done with jax.lax.top_k in this JAX glue.
            cur, _ = jax.lax.top_k(cur, k)
            total = total + jnp.mean(cur) * jnp.float32(tw[ci])
    return total


def _reference_loss(prediction, target, class_weights, training_weights,
                    use_top_k, top_k_ratio):
    """Pure-JAX reference mirroring the PyTorch forward."""
    B = prediction.shape[0]
    N = target.shape[1]
    total = jnp.float32(0.0)
    for i in range(N):
        t = target[:, i].reshape(B, -1).astype(jnp.int32)             # (B, HW)
        logits = prediction[:, 2 * i:2 * (i + 1)].reshape(B, 2, -1)   # (B, 2, HW)
        logp = jax.nn.log_softmax(logits.astype(jnp.float32), axis=1)
        valid = t != IGNORE_INDEX
        tc = jnp.where(valid, t, 0)
        picked = jnp.take_along_axis(logp, tc[:, None, :], axis=1)[:, 0]
        w = class_weights[i][tc]
        loss = jnp.where(valid, -w * picked, 0.0)
        if use_top_k[i]:
            k = max(1, int(top_k_ratio[i] * loss.shape[1]))
            loss = jax.lax.top_k(loss, k)[0]
        total = total + jnp.mean(loss) * jnp.float32(training_weights[i])
    return total


if __name__ == "__main__":
    key = jax.random.PRNGKey(0)
    B, N, H, W = 2, 3, 16, 16

    k1, k2, k3 = jax.random.split(key, 3)
    prediction = jax.random.normal(k1, (B, 2 * N, H, W), dtype=jnp.float32)
    # binary targets with some ignored pixels (255)
    tgt01 = jax.random.bernoulli(k2, 0.4, (B, N, H, W)).astype(jnp.int32)
    ignore_mask = jax.random.bernoulli(k3, 0.1, (B, N, H, W))
    target = jnp.where(ignore_mask, IGNORE_INDEX, tgt01).astype(jnp.int32)

    # Deterministic "module parameters" (shapes implied by __init__ / forward)
    class_weights = jnp.array([[1.0, 2.0],
                               [1.0, 5.0],
                               [0.5, 3.0]], dtype=jnp.float32)   # (N, 2)
    training_weights = [1.0, 0.5, 2.0]
    use_top_k = [True, False, True]
    top_k_ratio = [0.25, 1.0, 0.5]

    out = hdmap_loss(prediction, target, class_weights, training_weights,
                     use_top_k, top_k_ratio)
    out = jax.block_until_ready(out)

    ref = _reference_loss(prediction, target, class_weights, training_weights,
                          use_top_k, top_k_ratio)
    ref = jax.block_until_ready(ref)
    assert jnp.allclose(out, ref, rtol=1e-5, atol=1e-5), (out, ref)

    # All-plain / all-top-k configs exercise each kernel on its own.
    for flags in ([False, False, False], [True, True, True]):
        o = jax.block_until_ready(
            hdmap_loss(prediction, target, class_weights, training_weights,
                       flags, top_k_ratio))
        r = jax.block_until_ready(
            _reference_loss(prediction, target, class_weights, training_weights,
                            flags, top_k_ratio))
        assert jnp.allclose(o, r, rtol=1e-5, atol=1e-5), (flags, o, r)

    # uint8 targets (values {0,1,255}) exercise the reduced-bandwidth path.
    out_u8 = hdmap_loss(prediction, target.astype(jnp.uint8), class_weights,
                        training_weights, use_top_k, top_k_ratio)
    out_u8 = jax.block_until_ready(out_u8)
    assert jnp.allclose(out_u8, ref, rtol=1e-5, atol=1e-5), (out_u8, ref)

    # bf16 logits are shipped as bf16 and cast to f32 inside the kernel.
    pred_bf16 = prediction.astype(jnp.bfloat16)
    out_bf16 = hdmap_loss(pred_bf16, target, class_weights, training_weights,
                          use_top_k, top_k_ratio)
    out_bf16 = jax.block_until_ready(out_bf16)
    ref_bf16 = _reference_loss(pred_bf16, target, class_weights,
                               training_weights, use_top_k, top_k_ratio)
    ref_bf16 = jax.block_until_ready(ref_bf16)
    assert jnp.allclose(out_bf16, ref_bf16, rtol=1e-4, atol=1e-4), (out_bf16, ref_bf16)

    print("KERNEL_OK")
</pallas_src>

<mosaic_0001>
module attributes {stable_mosaic.version = 11 : i64} {
  func.func @_sum_kernel(%arg0: i32, %arg1: i32, %arg2: memref<1xi32, #tpu.memory_space<smem>>, %arg3: memref<1x2xf32, #tpu.memory_space<smem>>, %arg4: memref<2x1x2x1x256xf32, #tpu.memory_space<vmem>>, %arg5: memref<2x1x1x256xi32, #tpu.memory_space<vmem>>, %arg6: memref<1x1x256xf32, #tpu.memory_space<vmem>>) attributes {dimension_semantics = [#tpu.dimension_semantics<parallel>, #tpu.dimension_semantics<arbitrary>], iteration_bounds = array<i64: 1, 1>, scalar_prefetch = 1 : i64, scratch_operands = 0 : i64, tpu.core_type = #tpu.core_type<tc>, window_params = [{transform_indices = @transform_0, window_bounds = array<i64: 1, 2>}, {transform_indices = @transform_1, window_bounds = array<i64: 2, 1, 2, 1, 256>}, {transform_indices = @transform_2, window_bounds = array<i64: 2, 1, 1, 256>}, {transform_indices = @transform_3, window_bounds = array<i64: 1, 1, 256>}]} {
    %c0_i32 = arith.constant 0 : i32
    %0 = arith.cmpi eq, %arg1, %c0_i32 : i32
    %1 = arith.extui %0 : i1 to i32
    %c0_i32_0 = arith.constant 0 : i32
    %2 = arith.cmpi ne, %1, %c0_i32_0 : i32
    scf.if %2 {
      %cst_19 = arith.constant 0.000000e+00 : f32
      %40 = vector.broadcast %cst_19 : f32 to vector<1x1x256xf32>
      %c0_20 = arith.constant 0 : index
      %c0_21 = arith.constant 0 : index
      %c0_22 = arith.constant 0 : index
      %41 = vector.load %arg6[%c0_20, %c0_21, %c0_22] : memref<1x1x256xf32, #tpu.memory_space<vmem>>, vector<1x1x256xf32>
      tpu.vector_store %arg6[%c0_20, %c0_21, %c0_22], %40 {strides = array<i32>} : memref<1x1x256xf32, #tpu.memory_space<vmem>>, vector<1x1x256xf32>,
    } else {
    }
    %c0 = arith.constant 0 : index
    %c0_1 = arith.constant 0 : index
    %c0_2 = arith.constant 0 : index
    %c0_3 = arith.constant 0 : index
    %c0_4 = arith.constant 0 : index
    %3 = vector.load %arg4[%c0, %c0_1, %c0_2, %c0_3, %c0_4] : memref<2x1x2x1x256xf32, #tpu.memory_space<vmem>>, vector<2x1x2x1x256xf32>
    %c0_5 = arith.constant 0 : index
    %c0_6 = arith.constant 0 : index
    %c0_7 = arith.constant 0 : index
    %c0_8 = arith.constant 0 : index
    %4 = vector.load %arg5[%c0_5, %c0_6, %c0_7, %c0_8] : memref<2x1x1x256xi32, #tpu.memory_space<vmem>>, vector<2x1x1x256xi32>
    %5 = arith.index_cast %arg0 : i32 to index
    %c0_9 = arith.constant 0 : index
    %6 = memref.load %arg3[%5, %c0_9] : memref<1x2xf32, #tpu.memory_space<smem>>
    %7 = arith.index_cast %arg0 : i32 to index
    %c1 = arith.constant 1 : index
    %8 = memref.load %arg3[%7, %c1] : memref<1x2xf32, #tpu.memory_space<smem>>
    %9 = vector.extract_strided_slice %3 {offsets = [0, 0, 0, 0, 0], sizes = [2, 1, 1, 1, 256], strides = [1, 1, 1, 1, 1]} : vector<2x1x2x1x256xf32> to vector<2x1x1x1x256xf32>
    %10 = vector.shape_cast %9 : vector<2x1x1x1x256xf32> to vector<2x1x256xf32>
    %11 = vector.extract_strided_slice %3 {offsets = [0, 0, 1, 0, 0], sizes = [2, 1, 1, 1, 256], strides = [1, 1, 1, 1, 1]} : vector<2x1x2x1x256xf32> to vector<2x1x1x1x256xf32>
    %12 = vector.shape_cast %11 : vector<2x1x1x1x256xf32> to vector<2x1x256xf32>
    %13 = vector.shape_cast %4 : vector<2x1x1x256xi32> to vector<2x1x256xi32>
    %14 = arith.maximumf %10, %12 : vector<2x1x256xf32>
    %15 = arith.minimumf %10, %12 : vector<2x1x256xf32>
    %16 = arith.subf %15, %14 : vector<2x1x256xf32>
    %17 = math.exp %16 : vector<2x1x256xf32>
    %cst = arith.constant 1.000000e+00 : f32
    %18 = vector.broadcast %cst : f32 to vector<2x1x256xf32>
    %19 = arith.addf %18, %17 : vector<2x1x256xf32>
    %20 = math.log %19 : vector<2x1x256xf32>
    %21 = arith.addf %14, %20 : vector<2x1x256xf32>
    %c255_i32 = arith.constant 255 : i32
    %22 = vector.broadcast %c255_i32 : i32 to vector<2x1x256xi32>
    %23 = arith.cmpi ne, %13, %22 : vector<2x1x256xi32>
    %c1_i32 = arith.constant 1 : i32
    %24 = vector.broadcast %c1_i32 : i32 to vector<2x1x256xi32>
    %25 = arith.cmpi eq, %13, %24 : vector<2x1x256xi32>
    %26 = arith.select %25, %12, %10 : vector<2x1x256xi1>, vector<2x1x256xf32>
    %27 = vector.broadcast %8 : f32 to vector<2x1x256xf32>
    %28 = vector.broadcast %6 : f32 to vector<2x1x256xf32>
    %29 = arith.select %25, %27, %28 : vector<2x1x256xi1>, vector<2x1x256xf32>
    %30 = arith.subf %21, %26 : vector<2x1x256xf32>
    %31 = arith.mulf %29, %30 : vector<2x1x256xf32>
    %cst_10 = arith.constant 0.000000e+00 : f32
    %32 = vector.broadcast %cst_10 : f32 to vector<2x1x256xf32>
    %33 = arith.select %23, %31, %32 : vector<2x1x256xi1>, vector<2x1x256xf32>
    %cst_11 = arith.constant dense<0.000000e+00> : vector<1x256xf32>
    %34 = vector.multi_reduction <add>, %33, %cst_11 [0] : vector<2x1x256xf32> to vector<1x256xf32>
    %cst_12 = arith.constant dense<0.000000e+00> : vector<256xf32>
    %35 = vector.multi_reduction <add>, %34, %cst_12 [0] : vector<1x256xf32> to vector<256xf32>
    %c0_13 = arith.constant 0 : index
    %c0_14 = arith.constant 0 : index
    %c0_15 = arith.constant 0 : index
    %36 = vector.load %arg6[%c0_13, %c0_14, %c0_15] : memref<1x1x256xf32, #tpu.memory_space<vmem>>, vector<1x1x256xf32>
    %37 = vector.shape_cast %35 : vector<256xf32> to vector<1x1x256xf32>
    %38 = arith.addf %36, %37 : vector<1x1x256xf32>
    %c0_16 = arith.constant 0 : index
    %c0_17 = arith.constant 0 : index
    %c0_18 = arith.constant 0 : index
    %39 = vector.load %arg6[%c0_16, %c0_17, %c0_18] : memref<1x1x256xf32, #tpu.memory_space<vmem>>, vector<1x1x256xf32>
    tpu.vector_store %arg6[%c0_16, %c0_17, %c0_18], %38 {strides = array<i32>} : memref<1x1x256xf32, #tpu.memory_space<vmem>>, vector<1x1x256xf32>,
    return
  }
  func.func @transform_0(%arg0: i32, %arg1: i32, %arg2: memref<1xi32, #tpu.memory_space<smem>>) -> (i32, i32) {
    %c0_i32 = arith.constant 0 : i32
    %c0_i32_0 = arith.constant 0 : i32
    %c0_i32_1 = arith.constant 0 : i32
    return %c0_i32, %c0_i32_0 : i32, i32
  }
  func.func @transform_1(%arg0: i32, %arg1: i32, %arg2: memref<1xi32, #tpu.memory_space<smem>>) -> (i32, i32, i32, i32, i32) {
    %0 = arith.index_cast %arg0 : i32 to index
    %1 = memref.load %arg2[%0] : memref<1xi32, #tpu.memory_space<smem>>
    %c0_i32 = arith.constant 0 : i32
    %c0_i32_0 = arith.constant 0 : i32
    %c0_i32_1 = arith.constant 0 : i32
    %c0_i32_2 = arith.constant 0 : i32
    return %c0_i32, %1, %c0_i32_0, %arg1, %c0_i32_1 : i32, i32, i32, i32, i32
  }
  func.func @transform_2(%arg0: i32, %arg1: i32, %arg2: memref<1xi32, #tpu.memory_space<smem>>) -> (i32, i32, i32, i32) {
    %0 = arith.index_cast %arg0 : i32 to index
    %1 = memref.load %arg2[%0] : memref<1xi32, #tpu.memory_space<smem>>
    %c0_i32 = arith.constant 0 : i32
    %c0_i32_0 = arith.constant 0 : i32
    %c0_i32_1 = arith.constant 0 : i32
    return %c0_i32, %1, %arg1, %c0_i32_0 : i32, i32, i32, i32
  }
  func.func @transform_3(%arg0: i32, %arg1: i32, %arg2: memref<1xi32, #tpu.memory_space<smem>>) -> (i32, i32, i32) {
    %c0_i32 = arith.constant 0 : i32
    %c0_i32_0 = arith.constant 0 : i32
    %c0_i32_1 = arith.constant 0 : i32
    return %arg0, %c0_i32, %c0_i32_0 : i32, i32, i32
  }
}

</mosaic_0001>

<llo_original>
// kernel: tpu_custom_call.1
$region0: #{tpu_custom_call.1}
  #allocation0 [shape = 'u32[]', space=smem, size = 0x4, offset = 0x4, fixed_abs, tag = 'smem constant byte address 0x4 - core index']
  #allocation1 [shape = 'u32[144,128]{1,0:T(1,128)}', space=vmem, size = 0x12000, scoped, tag = 'internal scratch']
  #allocation2 [shape = 's32[1]{0}', space=sflag, size = 0x4, scoped, tag = 'scoped memory for tpu_custom_call.1']
  #allocation3 [shape = 's32[1]{0:T(128)S(6)}', space=smem, size = 0x200, scoped, tag = 'prefetched SMEM operand 0']
  #allocation12 [shape = 's32[]', space=sflag, size = 0x4, offset = 0, fixed_abs, tag = 'sflag constant byte address 0x0 - dummy sync flag']
  %s0 = inlined_call_operand.<no memory space> [shape: s32[1], index: 0, kind: input, shape index: {}]
  %s1 = inlined_call_operand.vmem [shape: f32[1,2], index: 1, kind: input, shape index: {}]
  %s2 = inlined_call_operand.hbm [shape: f32[2,3,2,1,256], index: 2, kind: input, shape index: {}]
  %s3 = inlined_call_operand.hbm [shape: s32[2,3,1,256], index: 3, kind: input, shape index: {}]
  %s4 = inlined_call_operand.hbm [shape: f32[1,1,256], index: 4, kind: output, shape index: {}]
  %s5 = sld [smem:[#allocation0]]
  $region38: #{tpu_custom_call.1} parent=0
    _
  %s7 = ssub.s32 1, %s5
  %s8 = scalar_select 0, %s7, %s5
  %9 = sst [smem:[#allocation3]] %s0
  $region1: #{tpu_custom_call.1} parent=0
    #allocation4 [shape = 'u8[512]{0}', space=smem, size = 0x200, scoped, tag = 'input window, operand 1, single buffered']
    #allocation5 [shape = 's32[1]{0}', space=sflag, size = 0x4, scoped, tag = 'scoped memory for tpu_custom_call.1']
    #allocation6 [shape = 's32[1]{0}', space=sflag, size = 0x4, scoped, tag = 'scoped memory for tpu_custom_call.1']
    #allocation7 [shape = 's32[1]{0}', space=sflag, size = 0x4, scoped, tag = 'scoped memory for tpu_custom_call.1']
    #allocation8 [shape = 'u8[4096]{0}', space=vmem, size = 0x1000, scoped, tag = 'input window, operand 2, single buffered']
    #allocation9 [shape = 'u8[2048]{0}', space=vmem, size = 0x800, scoped, tag = 'input window, operand 3, single buffered']
    #allocation10 [shape = 's32[1]{0}', space=sflag, size = 0x4, scoped, tag = 'scoped memory for tpu_custom_call.1']
    #allocation11 [shape = 'u8[1024]{0}', space=vmem, size = 0x400, scoped, tag = 'output window, operand 0, single buffered']
    %10 = vsyncpa [#allocation7], 0
    %11 = vsyncpa [#allocation5], 0
    %12 = vsyncpa [#allocation10], 0
    %13 = vsyncpa [#allocation6], 0
    // Predicated region
    $region2: #{tpu_custom_call.1} parent=1 // pred_check
      _
    $region3: #{tpu_custom_call.1} parent=1 // pred_check_branch
      %15 = sbr.rel (0) target = $region5
    $region4: #{tpu_custom_call.1} parent=1 // pred_region
      %s17 = ssub.s32 16, 16
      %18 = vsyncadd [#allocation7], %s17
      %s20 = sshll.u32 %s1, 4
      %s21 = int_to_ptr.vmem [resolvable:$true] %s20
      %23 = dma.vmem_to_smem %s21, 16, [#allocation4], [#allocation7]
    $region5: #{tpu_custom_call.1} parent=1 // pred_fallthru
      _
    // Predicated region
    $region6: #{tpu_custom_call.1} parent=1 // pred_check
      _
    $region7: #{tpu_custom_call.1} parent=1 // pred_check_branch
      %25 = sbr.rel (0) target = $region9
    $region8: #{tpu_custom_call.1} parent=1 // pred_region
      #allocation13 [shape = 'u32[6]{0}', space=smem, size = 0x18, scoped, tag = 'DMA stride descriptor']
      %s26 = sld [smem:[#allocation3]]
      %s28 = ssub.s32 128, 128
      %29 = vsyncadd [#allocation5], %s28
      %s30 = smul.addr %s26, 4
      %s31 = smul.addr %s30, 16
      %s32 = scalar_lea.hbm %s2, %s31
      %s34 = sshll.u32 1, 14
      %s35 = sxor.u32 4294967295, %s34
      %s37 = sld [smem:[#allocation0]]
      %s38 = sadd.s32 2, %s37
      %s40 = sshll.u32 7, 26
      %s41 = sxor.u32 4294967295, %s40
      %s42 = sand.u32 0, %s41
      %s43 = sshll.u32 %s38, 26
      %s44 = sor.u32 %s42, %s43
      %s45 = sshll.u32 [#allocation8], 4
      %s46 = int_to_ptr.vmem [resolvable:$true] %s45
      %52 = sst [smem:[#allocation13]] 192
      %s53 = scalar_lea.smem [#allocation13], 1
      %54 = sst [smem:[%s53]] 64
      %s55 = scalar_lea.smem [#allocation13], 2
      %56 = sst [smem:[%s55]] 2
      %s57 = scalar_lea.smem [#allocation13], 3
      %58 = sst [smem:[%s57]] 32
      %s59 = scalar_lea.smem [#allocation13], 4
      %60 = sst [smem:[%s59]] 32
      %s61 = scalar_lea.smem [#allocation13], 5
      %62 = sst [smem:[%s61]] 2
      %64 = dma.general %s32, 128, %s46, [#allocation5], 131072, [#allocation13], %s44, 0
    $region9: #{tpu_custom_call.1} parent=1 // pred_fallthru
      _
    // Predicated region
    $region10: #{tpu_custom_call.1} parent=1 // pred_check
      _
    $region11: #{tpu_custom_call.1} parent=1 // pred_check_branch
      %66 = sbr.rel (0) target = $region13
    $region12: #{tpu_custom_call.1} parent=1 // pred_region
      %s67 = sld [smem:[#allocation3]]
      %s69 = ssub.s32 64, 64
      %70 = vsyncadd [#allocation10], %s69
      %s71 = smul.addr %s67, 2
      %s72 = smul.addr %s71, 16
      %s73 = scalar_lea.hbm %s3, %s72
      %s74 = sshll.u32 [#allocation9], 4
      %s75 = int_to_ptr.vmem [resolvable:$true] %s74
      %80 = dma.hbm_to_vmem [thread:$0]  %s73, 64, %s75, [#allocation10], 96, 32, 2
    $region13: #{tpu_custom_call.1} parent=1 // pred_fallthru
      _
    // Predicated region
    $region14: #{tpu_custom_call.1} parent=1 // pred_check
      _
    $region15: #{tpu_custom_call.1} parent=1 // pred_check_branch
      %82 = sbr.rel (0) target = $region17
    $region16: #{tpu_custom_call.1} parent=1 // pred_region
      %83 = dma.done [#allocation7], 16
    $region17: #{tpu_custom_call.1} parent=1 // pred_fallthru
      _
    // Predicated region
    $region18: #{tpu_custom_call.1} parent=1 // pred_check
      _
    $region19: #{tpu_custom_call.1} parent=1 // pred_check_branch
      %85 = sbr.rel (0) target = $region21
    $region20: #{tpu_custom_call.1} parent=1 // pred_region
      %86 = dma.done [#allocation5], 128
    $region21: #{tpu_custom_call.1} parent=1 // pred_fallthru
      _
    // Predicated region
    $region22: #{tpu_custom_call.1} parent=1 // pred_check
      _
    $region23: #{tpu_custom_call.1} parent=1 // pred_check_branch
      %88 = sbr.rel (0) target = $region25
    $region24: #{tpu_custom_call.1} parent=1 // pred_region
      %89 = dma.done [#allocation10], 64
    $region25: #{tpu_custom_call.1} parent=1 // pred_fallthru
      _
    %90 = sfence
    %s91 = sld [smem:[#allocation3]]
    %s92 = sld [smem:[#allocation3]]
    %p93 = scmp.eq.s32.totalorder 0, 0
    // Predicated region
    $region26: #{tpu_custom_call.1} parent=1 // pred_check
      %p94 = pneg %p93
    $region27: #{tpu_custom_call.1} parent=1 // pred_check_branch
      %96 = sbr.rel (%p94) target = $region29
    $region28: #{tpu_custom_call.1} parent=1 // pred_region
      %v97 = vlaneseq
      %vm98 = vcmp.ge.s32.totalorder %v97, 0
      %vm99 = vcmp.lt.s32.totalorder %v97, 256
      %vm100 = vmand %vm98, %vm99
      %101 = vst.msk [vmem:[#allocation11] sm:$0x3] %vm100, 0.0
    $region29: #{tpu_custom_call.1} parent=1 // pred_fallthru
      _
    %v102 = vld [vmem:[#allocation8] sm:$0x3]
    %v103 = vld [vmem:[#allocation8 + $0x2] sm:$0x3]
    %v104 = vld [vmem:[#allocation8 + $0x4] sm:$0x3]
    %v105 = vld [vmem:[#allocation8 + $0x6] sm:$0x3]
    %v106 = vld [vmem:[#allocation9] sm:$0x3]
    %v107 = vld [vmem:[#allocation9 + $0x2] sm:$0x3]
    %s108 = smul.u32 0, 128
    %s109 = sld [smem:[#allocation4 + %s108]]
    %s110 = sadd.s32 %s108, 1
    %s111 = sld [smem:[#allocation4 + %s110]]
    %v112 = vmax.f32 %v102, %v103
    %v113 = vmax.f32 %v104, %v105
    %v114 = vmin.f32 %v102, %v103
    %v115 = vmin.f32 %v104, %v105
    %v116 = vsub.f32 %v114, %v112
    %v117 = vsub.f32 %v115, %v113
    %v118 = vmul.f32 %v116, 1.442695
    %v119 = vpow.pop %v118
    %v120 = vmul.f32 %v117, 1.442695
    %v121 = vpow.pop %v120
    %v122 = vadd.f32 %v119, 1.0
    %v123 = vadd.f32 %v121, 1.0
    %v124 = vlog2.pop %v122
    %v125 = vmul.f32 %v124, 0.6931472
    %v126 = vlog2.pop %v123
    %v127 = vmul.f32 %v126, 0.6931472
    %v128 = vadd.f32 %v112, %v125
    %v129 = vadd.f32 %v113, %v127
    %vm130 = vcmp.ne.s32.totalorder %v106, 255
    %vm131 = vcmp.ne.s32.totalorder %v107, 255
    %vm132 = vcmp.eq.s32.totalorder %v106, 1
    %vm133 = vcmp.eq.s32.totalorder %v107, 1
    %v134 = vsel %vm132, %v103, %v102
    %v135 = vsel %vm133, %v105, %v104
    %v136 = vstv %s111
    %v137 = vstv %s109
    %v138 = vsel %vm132, %v136, %v137
    %v139 = vsel %vm133, %v136, %v137
    %v140 = vsub.f32 %v128, %v134
    %v141 = vsub.f32 %v129, %v135
    %v142 = vmul.f32 %v138, %v140
    %v143 = vmul.f32 %v139, %v141
    %v144 = vsel %vm130, %v142, 0.0
    %v145 = vsel %vm131, %v143, 0.0
    %v148 = vlaneseq
    %v149 = vshrl.u32 %v148, 7
    %v150 = vsub.s32 0, %v149
    %v151 = vrot.slane %v144, %v150
    %v152 = vlaneseq
    %v153 = vshrl.u32 %v152, 7
    %v154 = vsub.s32 1, %v153
    %v155 = vrot.slane %v144, %v154
    %v156 = vlaneseq
    %v157 = vshrl.u32 %v156, 7
    %v158 = vsub.s32 0, %v157
    %v159 = vrot.slane %v145, %v158
    %v160 = vlaneseq
    %v161 = vshrl.u32 %v160, 7
    %v162 = vsub.s32 1, %v161
    %v163 = vrot.slane %v145, %v162
    %vm168 = vcmask 1040384
    %v169 = vsel %vm168, %v151, 0.0
    %v170 = vsel %vm168, %v159, 0.0
    %v171 = vadd.f32 %v169, %v170
    %v172 = vsel %vm168, %v155, 0.0
    %v173 = vsel %vm168, %v163, 0.0
    %v174 = vadd.f32 %v172, %v173
    %v175 = vadd.f32 %v171, 0.0
    %v176 = vadd.f32 %v174, 0.0
    %v177 = vld [vmem:[#allocation11] sm:$0x3]
    %v180 = vcombine.low %v175, %v176
    %v182 = vunpack.c.l.s4 1966171168
    %v183 = vunpack.c.0.s8 %v182
    %v184 = vlaneseq
    %v185 = vshrl.u32 %v184, 7
    %v186 = vsub.s32 %v183, %v185
    %v187 = vrot.slane %v180, %v186
    %v189 = vunpack.c.l.s4 1966171168
    %v190 = vunpack.c.0.s8 %v189
    %v191 = vlaneseq
    %v192 = vshrl.u32 %v191, 7
    %v193 = vsub.s32 %v190, %v192
    %v194 = vrot.slane %v187, %v193
    %v196 = vadd.f32 %v177, %v194
    %v197 = vlaneseq
    %vm198 = vcmp.ge.s32.totalorder %v197, 0
    %vm199 = vcmp.lt.s32.totalorder %v197, 256
    %vm200 = vmand %vm198, %vm199
    %201 = vst.msk [vmem:[#allocation11] sm:$0x3] %vm200, %v196
    // Predicated region
    $region30: #{tpu_custom_call.1} parent=1 // pred_check
      _
    $region31: #{tpu_custom_call.1} parent=1 // pred_check_branch
      %203 = sbr.rel (0) target = $region33
    $region32: #{tpu_custom_call.1} parent=1 // pred_region
      %s205 = ssub.s32 32, 32
      %206 = vsyncadd [#allocation6], %s205
      %s208 = sshll.u32 [#allocation11], 4
      %s209 = int_to_ptr.vmem [resolvable:$true] %s208
      %211 = dma.vmem_to_hbm [thread:$0]  %s209, 32, %s4, [#allocation6]
    $region33: #{tpu_custom_call.1} parent=1 // pred_fallthru
      _
    // Predicated region
    $region34: #{tpu_custom_call.1} parent=1 // pred_check
      _
    $region35: #{tpu_custom_call.1} parent=1 // pred_check_branch
      %213 = sbr.rel (0) target = $region37
    $region36: #{tpu_custom_call.1} parent=1 // pred_region
      %214 = dma.done [#allocation6], 32
    $region37: #{tpu_custom_call.1} parent=1 // pred_fallthru
      _
    %215 = vsyncpa [#allocation5], 1
    %216 = vsyncpa [#allocation10], 1
    %217 = vsyncpa [#allocation6], 1
    %218 = vsyncpa [#allocation7], 1

</llo_original>
